<compile_context>
chip_gen: v5e
topology: v5e:2x2
jax: 0.10.0
libtpu: 0.0.40
codegen_flags: <defaults>
</compile_context>

<pallas_src>
import functools

import jax
import jax.numpy as jnp
from jax.experimental import pallas as pl
from jax.experimental.pallas import tpu as pltpu

LANE = 128
MAX_TILE_ROWS = 2048          # 6 streams * 2 bufs * 2048*128*4B ~= 12.6 MiB
_NEG_PAD = -1.0e4             # sigmoid(-1e4) == 0, threshold -> 0
_NUM_PARTIALS = 10


def _iou_partial_kernel(ml_ref, cl_ref, dl_ref, mt_ref, ct_ref, dt_ref, out_ref,
                        *, tile_rows, total_rows, need_mask):
    f32 = jnp.float32
    ml = ml_ref[...].astype(f32)
    cl = cl_ref[...].astype(f32)
    dl = dl_ref[...].astype(f32)
    mt = mt_ref[...].astype(f32)
    ct = ct_ref[...].astype(f32)
    dt = dt_ref[...].astype(f32)

    s_mask = jax.nn.sigmoid(ml)
    s_cont = jax.nn.sigmoid(cl)
    t_dist = jnp.tanh(dl)
    th_mask = (s_mask > 0.5).astype(f32)
    th_cont = (s_cont > 0.5).astype(f32)

    if need_mask:
        # Ragged last grid block: rows >= total_rows hold stale VMEM garbage.
        row0 = pl.program_id(0) * tile_rows
        rid = jax.lax.broadcasted_iota(jnp.int32, ml.shape, 0) + row0
        valid = rid < total_rows
        zero = jnp.zeros((), f32)
        s_mask = jnp.where(valid, s_mask, zero)
        s_cont = jnp.where(valid, s_cont, zero)
        t_dist = jnp.where(valid, t_dist, zero)
        th_mask = jnp.where(valid, th_mask, zero)
        th_cont = jnp.where(valid, th_cont, zero)
        mt = jnp.where(valid, mt, zero)
        ct = jnp.where(valid, ct, zero)
        dt = jnp.where(valid, dt, zero)

    # Per-tile partial (intersection, total) for each of the 5 IoU pairs.
    # NB: contour_th IoU is measured against mask_tensor, as in the PyTorch module.
    partials = (
        jnp.sum(s_mask * mt), jnp.sum(s_mask + mt),
        jnp.sum(s_cont * ct), jnp.sum(s_cont + ct),
        jnp.sum(t_dist * dt), jnp.sum(t_dist + dt),
        jnp.sum(th_mask * mt), jnp.sum(th_mask + mt),
        jnp.sum(th_cont * mt), jnp.sum(th_cont + mt),
    )

    lane = jax.lax.broadcasted_iota(jnp.int32, (1, 8, LANE), 2)
    row = jnp.zeros((1, 8, LANE), f32)
    for k, v in enumerate(partials):
        row = jnp.where(lane == k, v, row)
    out_ref[...] = row


def _to_lane_slab(x, pad_value):
    """Flatten; pad to a multiple of 128 only if needed (sentinel); view as (rows, 128)."""
    flat = x.reshape(-1)
    n = flat.shape[0]
    rem = n % LANE
    if rem:
        flat = jnp.pad(flat, (0, LANE - rem), constant_values=pad_value)
    return flat.reshape(-1, LANE)


def instance_iou_score(inputs, mask_tensor, binary_contour_map_tensor,
                       distance_map_tensor, smooth=1.0):
    """inputs: (N, 3, H, W) logits; targets: (N, 1, H, W).  Returns 5 scalar IoUs."""
    # TODO(synk): if upstream can provide pre-split / bf16 0-1 targets, pass them
    # through directly to shave the channel-split copy + halve target HBM traffic.
    ml = _to_lane_slab(inputs[:, 0], _NEG_PAD)   # mask logits
    cl = _to_lane_slab(inputs[:, 1], _NEG_PAD)   # contour logits
    dl = _to_lane_slab(inputs[:, 2], 0.0)        # distance logits (tanh(0)=0)
    mt = _to_lane_slab(mask_tensor, 0.0)
    ct = _to_lane_slab(binary_contour_map_tensor, 0.0)
    dt = _to_lane_slab(distance_map_tensor, 0.0)

    rows = ml.shape[0]
    tile_rows = rows if rows <= MAX_TILE_ROWS else MAX_TILE_ROWS
    num_tiles = pl.cdiv(rows, tile_rows)
    need_mask = (rows % tile_rows) != 0

    kernel = functools.partial(_iou_partial_kernel, tile_rows=tile_rows,
                               total_rows=rows, need_mask=need_mask)

    in_spec = pl.BlockSpec((tile_rows, LANE), lambda i: (i, 0))
    out_spec = pl.BlockSpec((1, 8, LANE), lambda i: (i, 0, 0))

    # 6 double-buffered input tiles + tiny output, with headroom.
    vmem_bytes = 6 * 2 * tile_rows * LANE * 4 + 2 * 8 * LANE * 4
    vmem_limit = max(min(int(vmem_bytes * 1.5) + (2 << 20), 96 * 1024 * 1024),
                     4 * 1024 * 1024)

    partials = pl.pallas_call(
        kernel,
        out_shape=jax.ShapeDtypeStruct((num_tiles, 8, LANE), jnp.float32),
        grid=(num_tiles,),
        in_specs=[in_spec] * 6,
        out_specs=out_spec,
        compiler_params=pltpu.CompilerParams(
            dimension_semantics=("parallel",),
            vmem_limit_bytes=vmem_limit),
    )(ml, cl, dl, mt, ct, dt)

    sums = jnp.sum(partials[:, 0, :], axis=0)    # first 10 lanes hold the partials

    def iou(inter, total):
        union = total - inter
        return (inter + smooth) / (union + smooth)

    mask_iou = iou(sums[0], sums[1])
    contour_iou = iou(sums[2], sums[3])
    distance_iou = iou(sums[4], sums[5])
    mask_th_iou = iou(sums[6], sums[7])
    contour_th_iou = iou(sums[8], sums[9])
    # Order matches the PyTorch forward return.
    return mask_iou, contour_iou, distance_iou, mask_th_iou, contour_th_iou


def _reference(inputs, mask_t, cont_t, dist_t, smooth=1.0):
    def iou(a, b):
        a = a.reshape(-1).astype(jnp.float32)
        b = b.reshape(-1).astype(jnp.float32)
        inter = jnp.sum(a * b)
        total = jnp.sum(a + b)
        return (inter + smooth) / (total - inter + smooth)

    s0 = jax.nn.sigmoid(inputs[:, 0:1])
    s1 = jax.nn.sigmoid(inputs[:, 1:2])
    t2 = jnp.tanh(inputs[:, 2:3])
    th0 = jnp.where(s0 > 0.5, 1.0, 0.0)
    th1 = jnp.where(s1 > 0.5, 1.0, 0.0)
    return (iou(s0, mask_t), iou(s1, cont_t), iou(t2, dist_t),
            iou(th0, mask_t), iou(th1, mask_t))


def _run_case(key, N, H, W):
    k1, k2, k3, k4 = jax.random.split(key, 4)
    inputs = jax.random.normal(k1, (N, 3, H, W), dtype=jnp.float32)
    mask_tensor = (jax.random.uniform(k2, (N, 1, H, W)) > 0.5).astype(jnp.float32)
    contour_tensor = (jax.random.uniform(k3, (N, 1, H, W)) > 0.5).astype(jnp.float32)
    distance_tensor = jax.random.uniform(k4, (N, 1, H, W), dtype=jnp.float32)

    got = instance_iou_score(inputs, mask_tensor, contour_tensor, distance_tensor)
    got = jax.block_until_ready(got)
    want = _reference(inputs, mask_tensor, contour_tensor, distance_tensor)
    for g, w in zip(got, want):
        assert abs(float(g) - float(w)) < 2e-4, (float(g), float(w))


if __name__ == "__main__":
    key = jax.random.PRNGKey(0)
    ka, kb = jax.random.split(key)
    _run_case(ka, N=2, H=16, W=16)   # exact multiple of 128, no padding path
    _run_case(kb, N=2, H=17, W=19)   # ragged size, sentinel-pad path
    print("KERNEL_OK")
</pallas_src>

<mosaic_0001>
module attributes {stable_mosaic.version = 11 : i64} {
  func.func @_iou_partial_kernel(%arg0: i32, %arg1: memref<4x128xf32, #tpu.memory_space<vmem>>, %arg2: memref<4x128xf32, #tpu.memory_space<vmem>>, %arg3: memref<4x128xf32, #tpu.memory_space<vmem>>, %arg4: memref<4x128xf32, #tpu.memory_space<vmem>>, %arg5: memref<4x128xf32, #tpu.memory_space<vmem>>, %arg6: memref<4x128xf32, #tpu.memory_space<vmem>>, %arg7: memref<1x8x128xf32, #tpu.memory_space<vmem>>) attributes {dimension_semantics = [#tpu.dimension_semantics<parallel>], iteration_bounds = array<i64: 1>, scalar_prefetch = 0 : i64, scratch_operands = 0 : i64, tpu.core_type = #tpu.core_type<tc>, window_params = [{transform_indices = @transform_0, window_bounds = array<i64: 4, 128>}, {transform_indices = @transform_1, window_bounds = array<i64: 4, 128>}, {transform_indices = @transform_2, window_bounds = array<i64: 4, 128>}, {transform_indices = @transform_3, window_bounds = array<i64: 4, 128>}, {transform_indices = @transform_4, window_bounds = array<i64: 4, 128>}, {transform_indices = @transform_5, window_bounds = array<i64: 4, 128>}, {transform_indices = @transform_6, window_bounds = array<i64: 1, 8, 128>}]} {
    %c0 = arith.constant 0 : index
    %c0_0 = arith.constant 0 : index
    %0 = vector.load %arg1[%c0, %c0_0] : memref<4x128xf32, #tpu.memory_space<vmem>>, vector<4x128xf32>
    %c0_1 = arith.constant 0 : index
    %c0_2 = arith.constant 0 : index
    %1 = vector.load %arg2[%c0_1, %c0_2] : memref<4x128xf32, #tpu.memory_space<vmem>>, vector<4x128xf32>
    %c0_3 = arith.constant 0 : index
    %c0_4 = arith.constant 0 : index
    %2 = vector.load %arg3[%c0_3, %c0_4] : memref<4x128xf32, #tpu.memory_space<vmem>>, vector<4x128xf32>
    %c0_5 = arith.constant 0 : index
    %c0_6 = arith.constant 0 : index
    %3 = vector.load %arg4[%c0_5, %c0_6] : memref<4x128xf32, #tpu.memory_space<vmem>>, vector<4x128xf32>
    %c0_7 = arith.constant 0 : index
    %c0_8 = arith.constant 0 : index
    %4 = vector.load %arg5[%c0_7, %c0_8] : memref<4x128xf32, #tpu.memory_space<vmem>>, vector<4x128xf32>
    %c0_9 = arith.constant 0 : index
    %c0_10 = arith.constant 0 : index
    %5 = vector.load %arg6[%c0_9, %c0_10] : memref<4x128xf32, #tpu.memory_space<vmem>>, vector<4x128xf32>
    %6 = arith.negf %0 : vector<4x128xf32>
    %7 = math.exp %6 : vector<4x128xf32>
    %cst = arith.constant 1.000000e+00 : f32
    %8 = vector.broadcast %cst : f32 to vector<4x128xf32>
    %9 = arith.addf %8, %7 : vector<4x128xf32>
    %10 = arith.divf %8, %9 : vector<4x128xf32>
    %11 = arith.negf %1 : vector<4x128xf32>
    %12 = math.exp %11 : vector<4x128xf32>
    %cst_11 = arith.constant 1.000000e+00 : f32
    %13 = vector.broadcast %cst_11 : f32 to vector<4x128xf32>
    %14 = arith.addf %13, %12 : vector<4x128xf32>
    %15 = arith.divf %13, %14 : vector<4x128xf32>
    %16 = math.tanh %2 : vector<4x128xf32>
    %cst_12 = arith.constant 5.000000e-01 : f32
    %17 = vector.broadcast %cst_12 : f32 to vector<4x128xf32>
    %18 = arith.cmpf ogt, %10, %17 : vector<4x128xf32>
    %19 = arith.extui %18 : vector<4x128xi1> to vector<4x128xi32>
    %20 = arith.sitofp %19 : vector<4x128xi32> to vector<4x128xf32>
    %cst_13 = arith.constant 5.000000e-01 : f32
    %21 = vector.broadcast %cst_13 : f32 to vector<4x128xf32>
    %22 = arith.cmpf ogt, %15, %21 : vector<4x128xf32>
    %23 = arith.extui %22 : vector<4x128xi1> to vector<4x128xi32>
    %24 = arith.sitofp %23 : vector<4x128xi32> to vector<4x128xf32>
    %25 = arith.mulf %10, %3 : vector<4x128xf32>
    %26 = vector.shape_cast %25 : vector<4x128xf32> to vector<1x4x128xf32>
    %cst_14 = arith.constant dense<0.000000e+00> : vector<1xf32>
    %27 = vector.multi_reduction <add>, %26, %cst_14 [1, 2] : vector<1x4x128xf32> to vector<1xf32>
    %28 = vector.shape_cast %27 : vector<1xf32> to vector<1x1x1xf32>
    %29 = vector.extract %28[0, 0, 0] : f32 from vector<1x1x1xf32>
    %30 = arith.addf %10, %3 : vector<4x128xf32>
    %31 = vector.shape_cast %30 : vector<4x128xf32> to vector<1x4x128xf32>
    %cst_15 = arith.constant dense<0.000000e+00> : vector<1xf32>
    %32 = vector.multi_reduction <add>, %31, %cst_15 [1, 2] : vector<1x4x128xf32> to vector<1xf32>
    %33 = vector.shape_cast %32 : vector<1xf32> to vector<1x1x1xf32>
    %34 = vector.extract %33[0, 0, 0] : f32 from vector<1x1x1xf32>
    %35 = arith.mulf %15, %4 : vector<4x128xf32>
    %36 = vector.shape_cast %35 : vector<4x128xf32> to vector<1x4x128xf32>
    %cst_16 = arith.constant dense<0.000000e+00> : vector<1xf32>
    %37 = vector.multi_reduction <add>, %36, %cst_16 [1, 2] : vector<1x4x128xf32> to vector<1xf32>
    %38 = vector.shape_cast %37 : vector<1xf32> to vector<1x1x1xf32>
    %39 = vector.extract %38[0, 0, 0] : f32 from vector<1x1x1xf32>
    %40 = arith.addf %15, %4 : vector<4x128xf32>
    %41 = vector.shape_cast %40 : vector<4x128xf32> to vector<1x4x128xf32>
    %cst_17 = arith.constant dense<0.000000e+00> : vector<1xf32>
    %42 = vector.multi_reduction <add>, %41, %cst_17 [1, 2] : vector<1x4x128xf32> to vector<1xf32>
    %43 = vector.shape_cast %42 : vector<1xf32> to vector<1x1x1xf32>
    %44 = vector.extract %43[0, 0, 0] : f32 from vector<1x1x1xf32>
    %45 = arith.mulf %16, %5 : vector<4x128xf32>
    %46 = vector.shape_cast %45 : vector<4x128xf32> to vector<1x4x128xf32>
    %cst_18 = arith.constant dense<0.000000e+00> : vector<1xf32>
    %47 = vector.multi_reduction <add>, %46, %cst_18 [1, 2] : vector<1x4x128xf32> to vector<1xf32>
    %48 = vector.shape_cast %47 : vector<1xf32> to vector<1x1x1xf32>
    %49 = vector.extract %48[0, 0, 0] : f32 from vector<1x1x1xf32>
    %50 = arith.addf %16, %5 : vector<4x128xf32>
    %51 = vector.shape_cast %50 : vector<4x128xf32> to vector<1x4x128xf32>
    %cst_19 = arith.constant dense<0.000000e+00> : vector<1xf32>
    %52 = vector.multi_reduction <add>, %51, %cst_19 [1, 2] : vector<1x4x128xf32> to vector<1xf32>
    %53 = vector.shape_cast %52 : vector<1xf32> to vector<1x1x1xf32>
    %54 = vector.extract %53[0, 0, 0] : f32 from vector<1x1x1xf32>
    %55 = arith.mulf %20, %3 : vector<4x128xf32>
    %56 = vector.shape_cast %55 : vector<4x128xf32> to vector<1x4x128xf32>
    %cst_20 = arith.constant dense<0.000000e+00> : vector<1xf32>
    %57 = vector.multi_reduction <add>, %56, %cst_20 [1, 2] : vector<1x4x128xf32> to vector<1xf32>
    %58 = vector.shape_cast %57 : vector<1xf32> to vector<1x1x1xf32>
    %59 = vector.extract %58[0, 0, 0] : f32 from vector<1x1x1xf32>
    %60 = arith.addf %20, %3 : vector<4x128xf32>
    %61 = vector.shape_cast %60 : vector<4x128xf32> to vector<1x4x128xf32>
    %cst_21 = arith.constant dense<0.000000e+00> : vector<1xf32>
    %62 = vector.multi_reduction <add>, %61, %cst_21 [1, 2] : vector<1x4x128xf32> to vector<1xf32>
    %63 = vector.shape_cast %62 : vector<1xf32> to vector<1x1x1xf32>
    %64 = vector.extract %63[0, 0, 0] : f32 from vector<1x1x1xf32>
    %65 = arith.mulf %24, %3 : vector<4x128xf32>
    %66 = vector.shape_cast %65 : vector<4x128xf32> to vector<1x4x128xf32>
    %cst_22 = arith.constant dense<0.000000e+00> : vector<1xf32>
    %67 = vector.multi_reduction <add>, %66, %cst_22 [1, 2] : vector<1x4x128xf32> to vector<1xf32>
    %68 = vector.shape_cast %67 : vector<1xf32> to vector<1x1x1xf32>
    %69 = vector.extract %68[0, 0, 0] : f32 from vector<1x1x1xf32>
    %70 = arith.addf %24, %3 : vector<4x128xf32>
    %71 = vector.shape_cast %70 : vector<4x128xf32> to vector<1x4x128xf32>
    %cst_23 = arith.constant dense<0.000000e+00> : vector<1xf32>
    %72 = vector.multi_reduction <add>, %71, %cst_23 [1, 2] : vector<1x4x128xf32> to vector<1xf32>
    %73 = vector.shape_cast %72 : vector<1xf32> to vector<1x1x1xf32>
    %74 = vector.extract %73[0, 0, 0] : f32 from vector<1x1x1xf32>
    %75 = tpu.iota {dimensions = array<i32: 2>} : vector<1x8x128xi32>
    %cst_24 = arith.constant 0.000000e+00 : f32
    %76 = vector.broadcast %cst_24 : f32 to vector<1x8x128xf32>
    %c0_i32 = arith.constant 0 : i32
    %77 = vector.broadcast %c0_i32 : i32 to vector<1x8x128xi32>
    %78 = arith.cmpi eq, %75, %77 : vector<1x8x128xi32>
    %79 = vector.broadcast %29 : f32 to vector<1x8x128xf32>
    %80 = arith.select %78, %79, %76 : vector<1x8x128xi1>, vector<1x8x128xf32>
    %c1_i32 = arith.constant 1 : i32
    %81 = vector.broadcast %c1_i32 : i32 to vector<1x8x128xi32>
    %82 = arith.cmpi eq, %75, %81 : vector<1x8x128xi32>
    %83 = vector.broadcast %34 : f32 to vector<1x8x128xf32>
    %84 = arith.select %82, %83, %80 : vector<1x8x128xi1>, vector<1x8x128xf32>
    %c2_i32 = arith.constant 2 : i32
    %85 = vector.broadcast %c2_i32 : i32 to vector<1x8x128xi32>
    %86 = arith.cmpi eq, %75, %85 : vector<1x8x128xi32>
    %87 = vector.broadcast %39 : f32 to vector<1x8x128xf32>
    %88 = arith.select %86, %87, %84 : vector<1x8x128xi1>, vector<1x8x128xf32>
    %c3_i32 = arith.constant 3 : i32
    %89 = vector.broadcast %c3_i32 : i32 to vector<1x8x128xi32>
    %90 = arith.cmpi eq, %75, %89 : vector<1x8x128xi32>
    %91 = vector.broadcast %44 : f32 to vector<1x8x128xf32>
    %92 = arith.select %90, %91, %88 : vector<1x8x128xi1>, vector<1x8x128xf32>
    %c4_i32 = arith.constant 4 : i32
    %93 = vector.broadcast %c4_i32 : i32 to vector<1x8x128xi32>
    %94 = arith.cmpi eq, %75, %93 : vector<1x8x128xi32>
    %95 = vector.broadcast %49 : f32 to vector<1x8x128xf32>
    %96 = arith.select %94, %95, %92 : vector<1x8x128xi1>, vector<1x8x128xf32>
    %c5_i32 = arith.constant 5 : i32
    %97 = vector.broadcast %c5_i32 : i32 to vector<1x8x128xi32>
    %98 = arith.cmpi eq, %75, %97 : vector<1x8x128xi32>
    %99 = vector.broadcast %54 : f32 to vector<1x8x128xf32>
    %100 = arith.select %98, %99, %96 : vector<1x8x128xi1>, vector<1x8x128xf32>
    %c6_i32 = arith.constant 6 : i32
    %101 = vector.broadcast %c6_i32 : i32 to vector<1x8x128xi32>
    %102 = arith.cmpi eq, %75, %101 : vector<1x8x128xi32>
    %103 = vector.broadcast %59 : f32 to vector<1x8x128xf32>
    %104 = arith.select %102, %103, %100 : vector<1x8x128xi1>, vector<1x8x128xf32>
    %c7_i32 = arith.constant 7 : i32
    %105 = vector.broadcast %c7_i32 : i32 to vector<1x8x128xi32>
    %106 = arith.cmpi eq, %75, %105 : vector<1x8x128xi32>
    %107 = vector.broadcast %64 : f32 to vector<1x8x128xf32>
    %108 = arith.select %106, %107, %104 : vector<1x8x128xi1>, vector<1x8x128xf32>
    %c8_i32 = arith.constant 8 : i32
    %109 = vector.broadcast %c8_i32 : i32 to vector<1x8x128xi32>
    %110 = arith.cmpi eq, %75, %109 : vector<1x8x128xi32>
    %111 = vector.broadcast %69 : f32 to vector<1x8x128xf32>
    %112 = arith.select %110, %111, %108 : vector<1x8x128xi1>, vector<1x8x128xf32>
    %c9_i32 = arith.constant 9 : i32
    %113 = vector.broadcast %c9_i32 : i32 to vector<1x8x128xi32>
    %114 = arith.cmpi eq, %75, %113 : vector<1x8x128xi32>
    %115 = vector.broadcast %74 : f32 to vector<1x8x128xf32>
    %116 = arith.select %114, %115, %112 : vector<1x8x128xi1>, vector<1x8x128xf32>
    %c0_25 = arith.constant 0 : index
    %c0_26 = arith.constant 0 : index
    %c0_27 = arith.constant 0 : index
    %117 = vector.load %arg7[%c0_25, %c0_26, %c0_27] : memref<1x8x128xf32, #tpu.memory_space<vmem>>, vector<1x8x128xf32>
    tpu.vector_store %arg7[%c0_25, %c0_26, %c0_27], %116 {strides = array<i32>} : memref<1x8x128xf32, #tpu.memory_space<vmem>>, vector<1x8x128xf32>,
    return
  }
  func.func @transform_0(%arg0: i32) -> (i32, i32) {
    %c0_i32 = arith.constant 0 : i32
    %c0_i32_0 = arith.constant 0 : i32
    return %arg0, %c0_i32 : i32, i32
  }
  func.func @transform_1(%arg0: i32) -> (i32, i32) {
    %c0_i32 = arith.constant 0 : i32
    %c0_i32_0 = arith.constant 0 : i32
    return %arg0, %c0_i32 : i32, i32
  }
  func.func @transform_2(%arg0: i32) -> (i32, i32) {
    %c0_i32 = arith.constant 0 : i32
    %c0_i32_0 = arith.constant 0 : i32
    return %arg0, %c0_i32 : i32, i32
  }
  func.func @transform_3(%arg0: i32) -> (i32, i32) {
    %c0_i32 = arith.constant 0 : i32
    %c0_i32_0 = arith.constant 0 : i32
    return %arg0, %c0_i32 : i32, i32
  }
  func.func @transform_4(%arg0: i32) -> (i32, i32) {
    %c0_i32 = arith.constant 0 : i32
    %c0_i32_0 = arith.constant 0 : i32
    return %arg0, %c0_i32 : i32, i32
  }
  func.func @transform_5(%arg0: i32) -> (i32, i32) {
    %c0_i32 = arith.constant 0 : i32
    %c0_i32_0 = arith.constant 0 : i32
    return %arg0, %c0_i32 : i32, i32
  }
  func.func @transform_6(%arg0: i32) -> (i32, i32, i32) {
    %c0_i32 = arith.constant 0 : i32
    %c0_i32_0 = arith.constant 0 : i32
    %c0_i32_1 = arith.constant 0 : i32
    return %arg0, %c0_i32, %c0_i32_0 : i32, i32, i32
  }
}

</mosaic_0001>

<llo_original>
// kernel: tpu_custom_call.1
$region0: #{tpu_custom_call.1}
  #allocation0 [shape = 'u32[]', space=smem, size = 0x4, offset = 0x4, fixed_abs, tag = 'smem constant byte address 0x4 - core index']
  #allocation1 [shape = 'u32[72,128]{1,0:T(1,128)}', space=vmem, size = 0x9000, scoped, tag = 'internal scratch']
  %s0 = inlined_call_operand.hbm [shape: f32[4,128], index: 0, kind: input, shape index: {}]
  %s1 = inlined_call_operand.hbm [shape: f32[4,128], index: 1, kind: input, shape index: {}]
  %s2 = inlined_call_operand.hbm [shape: f32[4,128], index: 2, kind: input, shape index: {}]
  %s3 = inlined_call_operand.hbm [shape: f32[4,128], index: 3, kind: input, shape index: {}]
  %s4 = inlined_call_operand.hbm [shape: f32[4,128], index: 4, kind: input, shape index: {}]
  %s5 = inlined_call_operand.vmem [shape: f32[4,128], index: 5, kind: input, shape index: {}]
  %s6 = inlined_call_operand.hbm [shape: f32[1,8,128], index: 6, kind: output, shape index: {}]
  %s7 = sld [smem:[#allocation0]]
  $region54: #{tpu_custom_call.1} parent=0
    _
  %s9 = ssub.s32 1, %s7
  %s10 = scalar_select 0, %s9, %s7
  $region1: #{tpu_custom_call.1} parent=0
    #allocation2 [shape = 'u8[2048]{0}', space=vmem, size = 0x800, scoped, tag = 'input window, operand 0, single buffered']
    #allocation3 [shape = 's32[1]{0}', space=sflag, size = 0x4, scoped, tag = 'scoped memory for tpu_custom_call.1']
    #allocation4 [shape = 's32[1]{0}', space=sflag, size = 0x4, scoped, tag = 'scoped memory for tpu_custom_call.1']
    #allocation5 [shape = 'u8[2048]{0}', space=vmem, size = 0x800, scoped, tag = 'input window, operand 1, single buffered']
    #allocation6 [shape = 's32[1]{0}', space=sflag, size = 0x4, scoped, tag = 'scoped memory for tpu_custom_call.1']
    #allocation7 [shape = 'u8[2048]{0}', space=vmem, size = 0x800, scoped, tag = 'input window, operand 2, single buffered']
    #allocation8 [shape = 'u8[2048]{0}', space=vmem, size = 0x800, scoped, tag = 'input window, operand 3, single buffered']
    #allocation9 [shape = 's32[1]{0}', space=sflag, size = 0x4, scoped, tag = 'scoped memory for tpu_custom_call.1']
    #allocation10 [shape = 'u8[2048]{0}', space=vmem, size = 0x800, scoped, tag = 'input window, operand 4, single buffered']
    #allocation11 [shape = 'u8[4096]{0}', space=vmem, size = 0x1000, scoped, tag = 'output window, operand 0, single buffered']
    %11 = vsyncpa [#allocation3], 0
    %12 = vsyncpa [#allocation6], 0
    %13 = vsyncpa [#allocation9], 0
    %14 = vsyncpa [#allocation4], 0
    // Predicated region
    $region2: #{tpu_custom_call.1} parent=1 // pred_check
      _
    $region3: #{tpu_custom_call.1} parent=1 // pred_check_branch
      %16 = sbr.rel (0) target = $region5
    $region4: #{tpu_custom_call.1} parent=1 // pred_region
      %18 = vsyncadd [#allocation3], 0
      %s20 = sshll.u32 %s0, 4
      %s21 = int_to_ptr.hbm [resolvable:$true] %s20
      %s22 = sshll.u32 [#allocation2], 4
      %s23 = int_to_ptr.vmem [resolvable:$true] %s22
      %25 = dma.hbm_to_vmem [thread:$0]  %s21, 64, %s23, [#allocation3]
    $region5: #{tpu_custom_call.1} parent=1 // pred_fallthru
      _
    // Predicated region
    $region6: #{tpu_custom_call.1} parent=1 // pred_check
      _
    $region7: #{tpu_custom_call.1} parent=1 // pred_check_branch
      %27 = sbr.rel (0) target = $region9
    $region8: #{tpu_custom_call.1} parent=1 // pred_region
      %29 = vsyncadd [#allocation6], 0
      %s31 = sshll.u32 %s1, 4
      %s32 = int_to_ptr.hbm [resolvable:$true] %s31
      %s33 = sshll.u32 [#allocation5], 4
      %s34 = int_to_ptr.vmem [resolvable:$true] %s33
      %36 = dma.hbm_to_vmem [thread:$0]  %s32, 64, %s34, [#allocation6]
    $region9: #{tpu_custom_call.1} parent=1 // pred_fallthru
      _
    // Predicated region
    $region10: #{tpu_custom_call.1} parent=1 // pred_check
      _
    $region11: #{tpu_custom_call.1} parent=1 // pred_check_branch
      %38 = sbr.rel (0) target = $region13
    $region12: #{tpu_custom_call.1} parent=1 // pred_region
      %40 = vsyncadd [#allocation6], 0
      %s42 = sshll.u32 %s2, 4
      %s43 = int_to_ptr.hbm [resolvable:$true] %s42
      %s44 = sshll.u32 [#allocation7], 4
      %s45 = int_to_ptr.vmem [resolvable:$true] %s44
      %47 = dma.hbm_to_vmem [thread:$0]  %s43, 64, %s45, [#allocation6]
    $region13: #{tpu_custom_call.1} parent=1 // pred_fallthru
      _
    // Predicated region
    $region14: #{tpu_custom_call.1} parent=1 // pred_check
      _
    $region15: #{tpu_custom_call.1} parent=1 // pred_check_branch
      %49 = sbr.rel (0) target = $region17
    $region16: #{tpu_custom_call.1} parent=1 // pred_region
      %51 = vsyncadd [#allocation9], 0
      %s53 = sshll.u32 %s3, 4
      %s54 = int_to_ptr.hbm [resolvable:$true] %s53
      %s55 = sshll.u32 [#allocation8], 4
      %s56 = int_to_ptr.vmem [resolvable:$true] %s55
      %58 = dma.hbm_to_vmem [thread:$0]  %s54, 64, %s56, [#allocation9]
    $region17: #{tpu_custom_call.1} parent=1 // pred_fallthru
      _
    // Predicated region
    $region18: #{tpu_custom_call.1} parent=1 // pred_check
      _
    $region19: #{tpu_custom_call.1} parent=1 // pred_check_branch
      %60 = sbr.rel (0) target = $region21
    $region20: #{tpu_custom_call.1} parent=1 // pred_region
      %62 = vsyncadd [#allocation9], 0
      %s64 = sshll.u32 %s4, 4
      %s65 = int_to_ptr.hbm [resolvable:$true] %s64
      %s66 = sshll.u32 [#allocation10], 4
      %s67 = int_to_ptr.vmem [resolvable:$true] %s66
      %69 = dma.hbm_to_vmem [thread:$0]  %s65, 64, %s67, [#allocation9]
    $region21: #{tpu_custom_call.1} parent=1 // pred_fallthru
      _
    // Predicated region
    $region22: #{tpu_custom_call.1} parent=1 // pred_check
      _
    $region23: #{tpu_custom_call.1} parent=1 // pred_check_branch
      %71 = sbr.rel (0) target = $region25
    $region24: #{tpu_custom_call.1} parent=1 // pred_region
      _
    $region25: #{tpu_custom_call.1} parent=1 // pred_fallthru
      _
    // Predicated region
    $region26: #{tpu_custom_call.1} parent=1 // pred_check
      _
    $region27: #{tpu_custom_call.1} parent=1 // pred_check_branch
      %73 = sbr.rel (0) target = $region29
    $region28: #{tpu_custom_call.1} parent=1 // pred_region
      %75 = dma.done [#allocation3], 64
    $region29: #{tpu_custom_call.1} parent=1 // pred_fallthru
      _
    // Predicated region
    $region30: #{tpu_custom_call.1} parent=1 // pred_check
      _
    $region31: #{tpu_custom_call.1} parent=1 // pred_check_branch
      %77 = sbr.rel (0) target = $region33
    $region32: #{tpu_custom_call.1} parent=1 // pred_region
      %79 = dma.done [#allocation6], 64
    $region33: #{tpu_custom_call.1} parent=1 // pred_fallthru
      _
    // Predicated region
    $region34: #{tpu_custom_call.1} parent=1 // pred_check
      _
    $region35: #{tpu_custom_call.1} parent=1 // pred_check_branch
      %81 = sbr.rel (0) target = $region37
    $region36: #{tpu_custom_call.1} parent=1 // pred_region
      %83 = dma.done [#allocation6], 64
    $region37: #{tpu_custom_call.1} parent=1 // pred_fallthru
      _
    // Predicated region
    $region38: #{tpu_custom_call.1} parent=1 // pred_check
      _
    $region39: #{tpu_custom_call.1} parent=1 // pred_check_branch
      %85 = sbr.rel (0) target = $region41
    $region40: #{tpu_custom_call.1} parent=1 // pred_region
      %87 = dma.done [#allocation9], 64
    $region41: #{tpu_custom_call.1} parent=1 // pred_fallthru
      _
    // Predicated region
    $region42: #{tpu_custom_call.1} parent=1 // pred_check
      _
    $region43: #{tpu_custom_call.1} parent=1 // pred_check_branch
      %89 = sbr.rel (0) target = $region45
    $region44: #{tpu_custom_call.1} parent=1 // pred_region
      %91 = dma.done [#allocation9], 64
    $region45: #{tpu_custom_call.1} parent=1 // pred_fallthru
      _
    %v92 = vld [vmem:[#allocation2] sm:$0xf]
    %v93 = vld [vmem:[#allocation5] sm:$0xf]
    %v94 = vld [vmem:[#allocation7] sm:$0xf]
    %v95 = vld [vmem:[#allocation8] sm:$0xf]
    %v96 = vld [vmem:[#allocation10] sm:$0xf]
    %v97 = vld [vmem:[%s5] sm:$0xf]
    %v98 = vxor.u32 %v92, 2147483648
    %v99 = vmul.f32 %v98, 1.442695
    %v100 = vpow.pop %v99
    %v101 = vadd.f32 %v100, 1.0
    %v102 = vrcp.pop %v101
    %v103 = vmul.f32 %v101, %v102
    %v104 = vsub.f32 1.0, %v103
    %v105 = vmul.f32 %v102, %v104
    %v106 = vadd.f32 %v102, %v105
    %vm107 = vweird.f32 %v101
    %vm108 = vweird.f32 %v102
    %vm109 = vmor %vm107, %vm108
    %v110 = vsel %vm109, %v102, %v106
    %v111 = vand.u32 2147483647, %v101
    %vm112 = vcmp.eq.f32.partialorder %v111, 8.507059e+37
    %v113 = vand.u32 %v101, 2147483648
    %v114 = vor.u32 1.1754944e-38, %v113
    %v115 = vsel %vm112, %v114, %v110
    %v116 = vmul.f32 1.0, %v115
    %v117 = vxor.u32 %v93, 2147483648
    %v118 = vmul.f32 %v117, 1.442695
    %v119 = vpow.pop %v118
    %v120 = vadd.f32 %v119, 1.0
    %v121 = vrcp.pop %v120
    %v122 = vmul.f32 %v120, %v121
    %v123 = vsub.f32 1.0, %v122
    %v124 = vmul.f32 %v121, %v123
    %v125 = vadd.f32 %v121, %v124
    %vm126 = vweird.f32 %v120
    %vm127 = vweird.f32 %v121
    %vm128 = vmor %vm126, %vm127
    %v129 = vsel %vm128, %v121, %v125
    %v130 = vand.u32 2147483647, %v120
    %vm131 = vcmp.eq.f32.partialorder %v130, 8.507059e+37
    %v132 = vand.u32 %v120, 2147483648
    %v133 = vor.u32 1.1754944e-38, %v132
    %v134 = vsel %vm131, %v133, %v129
    %v135 = vmul.f32 1.0, %v134
    %v136 = vtanh.pop %v94
    %vm137 = vcmp.gt.f32.partialorder %v116, 0.5
    %v138 = vsel %vm137, 1, 0
    %v139 = vcvt.s32.f32 %v138
    %vm140 = vcmp.gt.f32.partialorder %v135, 0.5
    %v141 = vsel %vm140, 1, 0
    %v142 = vcvt.s32.f32 %v141
    %v143 = vmul.f32 %v116, %v95
    %vm144 = vcmask 1043456
    %v145 = vsel %vm144, %v143, 0.0
    %146 = vadd.xlane.f32.xlu0 %v145
    %v147 = vpop.xlane.xlu0 %146
    %v148 = vrot.slane %v147, 4
    %v149 = vadd.f32 %v147, %v148
    %v150 = vrot.slane %v149, 2
    %v151 = vadd.f32 %v149, %v150
    %v152 = vrot.slane %v151, 1
    %v153 = vadd.f32 %v151, %v152
    %s154 = vtos %v153
    %v155 = vadd.f32 %v116, %v95
    %v156 = vsel %vm144, %v155, 0.0
    %157 = vadd.xlane.f32.xlu0 %v156
    %v158 = vpop.xlane.xlu0 %157
    %v159 = vrot.slane %v158, 4
    %v160 = vadd.f32 %v158, %v159
    %v161 = vrot.slane %v160, 2
    %v162 = vadd.f32 %v160, %v161
    %v163 = vrot.slane %v162, 1
    %v164 = vadd.f32 %v162, %v163
    %s165 = vtos %v164
    %v166 = vmul.f32 %v135, %v96
    %v167 = vsel %vm144, %v166, 0.0
    %168 = vadd.xlane.f32.xlu0 %v167
    %v169 = vpop.xlane.xlu0 %168
    %v170 = vrot.slane %v169, 4
    %v171 = vadd.f32 %v169, %v170
    %v172 = vrot.slane %v171, 2
    %v173 = vadd.f32 %v171, %v172
    %v174 = vrot.slane %v173, 1
    %v175 = vadd.f32 %v173, %v174
    %s176 = vtos %v175
    %v177 = vadd.f32 %v135, %v96
    %v178 = vsel %vm144, %v177, 0.0
    %179 = vadd.xlane.f32.xlu0 %v178
    %v180 = vpop.xlane.xlu0 %179
    %v181 = vrot.slane %v180, 4
    %v182 = vadd.f32 %v180, %v181
    %v183 = vrot.slane %v182, 2
    %v184 = vadd.f32 %v182, %v183
    %v185 = vrot.slane %v184, 1
    %v186 = vadd.f32 %v184, %v185
    %s187 = vtos %v186
    %v188 = vmul.f32 %v136, %v97
    %v189 = vsel %vm144, %v188, 0.0
    %190 = vadd.xlane.f32.xlu0 %v189
    %v191 = vpop.xlane.xlu0 %190
    %v192 = vrot.slane %v191, 4
    %v193 = vadd.f32 %v191, %v192
    %v194 = vrot.slane %v193, 2
    %v195 = vadd.f32 %v193, %v194
    %v196 = vrot.slane %v195, 1
    %v197 = vadd.f32 %v195, %v196
    %s198 = vtos %v197
    %v199 = vadd.f32 %v136, %v97
    %v200 = vsel %vm144, %v199, 0.0
    %201 = vadd.xlane.f32.xlu0 %v200
    %v202 = vpop.xlane.xlu0 %201
    %v203 = vrot.slane %v202, 4
    %v204 = vadd.f32 %v202, %v203
    %v205 = vrot.slane %v204, 2
    %v206 = vadd.f32 %v204, %v205
    %v207 = vrot.slane %v206, 1
    %v208 = vadd.f32 %v206, %v207
    %s209 = vtos %v208
    %v210 = vmul.f32 %v139, %v95
    %v211 = vsel %vm144, %v210, 0.0
    %212 = vadd.xlane.f32.xlu0 %v211
    %v213 = vpop.xlane.xlu0 %212
    %v214 = vrot.slane %v213, 4
    %v215 = vadd.f32 %v213, %v214
    %v216 = vrot.slane %v215, 2
    %v217 = vadd.f32 %v215, %v216
    %v218 = vrot.slane %v217, 1
    %v219 = vadd.f32 %v217, %v218
    %s220 = vtos %v219
    %v221 = vadd.f32 %v139, %v95
    %v222 = vsel %vm144, %v221, 0.0
    %223 = vadd.xlane.f32.xlu0 %v222
    %v224 = vpop.xlane.xlu0 %223
    %v225 = vrot.slane %v224, 4
    %v226 = vadd.f32 %v224, %v225
    %v227 = vrot.slane %v226, 2
    %v228 = vadd.f32 %v226, %v227
    %v229 = vrot.slane %v228, 1
    %v230 = vadd.f32 %v228, %v229
    %s231 = vtos %v230
    %v232 = vmul.f32 %v142, %v95
    %v233 = vsel %vm144, %v232, 0.0
    %234 = vadd.xlane.f32.xlu0 %v233
    %v235 = vpop.xlane.xlu0 %234
    %v236 = vrot.slane %v235, 4
    %v237 = vadd.f32 %v235, %v236
    %v238 = vrot.slane %v237, 2
    %v239 = vadd.f32 %v237, %v238
    %v240 = vrot.slane %v239, 1
    %v241 = vadd.f32 %v239, %v240
    %s242 = vtos %v241
    %v243 = vadd.f32 %v142, %v95
    %v244 = vsel %vm144, %v243, 0.0
    %245 = vadd.xlane.f32.xlu0 %v244
    %v246 = vpop.xlane.xlu0 %245
    %v247 = vrot.slane %v246, 4
    %v248 = vadd.f32 %v246, %v247
    %v249 = vrot.slane %v248, 2
    %v250 = vadd.f32 %v248, %v249
    %v251 = vrot.slane %v250, 1
    %v252 = vadd.f32 %v250, %v251
    %s253 = vtos %v252
    %v254 = vlaneseq
    %v255 = vand.u32 %v254, 127
    %vm256 = vcmp.eq.s32.totalorder %v255, 0
    %v257 = vstv %s154
    %v258 = vsel %vm256, %v257, 0.0
    %vm259 = vcmp.eq.s32.totalorder %v255, 1
    %v260 = vstv %s165
    %v261 = vsel %vm259, %v260, %v258
    %vm262 = vcmp.eq.s32.totalorder %v255, 2
    %v263 = vstv %s176
    %v264 = vsel %vm262, %v263, %v261
    %vm265 = vcmp.eq.s32.totalorder %v255, 3
    %v266 = vstv %s187
    %v267 = vsel %vm265, %v266, %v264
    %vm268 = vcmp.eq.s32.totalorder %v255, 4
    %v269 = vstv %s198
    %v270 = vsel %vm268, %v269, %v267
    %vm271 = vcmp.eq.s32.totalorder %v255, 5
    %v272 = vstv %s209
    %v273 = vsel %vm271, %v272, %v270
    %vm274 = vcmp.eq.s32.totalorder %v255, 6
    %v275 = vstv %s220
    %v276 = vsel %vm274, %v275, %v273
    %vm277 = vcmp.eq.s32.totalorder %v255, 7
    %v278 = vstv %s231
    %v279 = vsel %vm277, %v278, %v276
    %vm280 = vcmp.eq.s32.totalorder %v255, 8
    %v281 = vstv %s242
    %v282 = vsel %vm280, %v281, %v279
    %vm283 = vcmp.eq.s32.totalorder %v255, 9
    %v284 = vstv %s253
    %v285 = vsel %vm283, %v284, %v282
    %286 = vst [vmem:[#allocation11] sm:$0xff] %v285
    // Predicated region
    $region46: #{tpu_custom_call.1} parent=1 // pred_check
      _
    $region47: #{tpu_custom_call.1} parent=1 // pred_check_branch
      %288 = sbr.rel (0) target = $region49
    $region48: #{tpu_custom_call.1} parent=1 // pred_region
      %290 = vsyncadd [#allocation4], 0
      %s292 = sshll.u32 [#allocation11], 4
      %s293 = int_to_ptr.vmem [resolvable:$true] %s292
      %s294 = sshll.u32 %s6, 4
      %s295 = int_to_ptr.hbm [resolvable:$true] %s294
      %297 = dma.vmem_to_hbm [thread:$0]  %s293, 128, %s295, [#allocation4]
    $region49: #{tpu_custom_call.1} parent=1 // pred_fallthru
      _
    // Predicated region
    $region50: #{tpu_custom_call.1} parent=1 // pred_check
      _
    $region51: #{tpu_custom_call.1} parent=1 // pred_check_branch
      %299 = sbr.rel (0) target = $region53
    $region52: #{tpu_custom_call.1} parent=1 // pred_region
      %301 = dma.done [#allocation4], 128
    $region53: #{tpu_custom_call.1} parent=1 // pred_fallthru
      _
    %302 = vsyncpa [#allocation3], 1
    %303 = vsyncpa [#allocation6], 1
    %304 = vsyncpa [#allocation9], 1
    %305 = vsyncpa [#allocation4], 1

</llo_original>
